<compile_context>
chip_gen: v5e
topology: v5e:2x2
jax: 0.10.0
libtpu: 0.0.40
codegen_flags: <defaults>
</compile_context>

<pallas_src>
import functools

import jax
import jax.numpy as jnp
from jax.experimental import pallas as pl
from jax.experimental.pallas import tpu as pltpu

COMPUTE_DTYPE = jnp.bfloat16   # MXU-native streams; accumulation stays f32
TM_MAX = 512                   # row tile cap (batch / embedding rows)
TN_SCORE = 2048                # score-matmul output-column tile cap

_VMEM_LIMIT = 48 * 1024 * 1024
_CP_ROWS = pltpu.CompilerParams(dimension_semantics=("parallel",),
                                vmem_limit_bytes=_VMEM_LIMIT)
_CP_2D = pltpu.CompilerParams(dimension_semantics=("parallel", "parallel"),
                              vmem_limit_bytes=_VMEM_LIMIT)


def _round_up(n, m):
    return (n + m - 1) // m * m


def _row_tile(n):
    return n if n <= TM_MAX else TM_MAX


# ----------------------------------------------------------------------------
# Pallas kernels
# ----------------------------------------------------------------------------
def _source_branch_kernel(*refs, num_plain_blocks):
    """Whole source branch for one row tile.

    refs = [x, wid, sid, w1, s1, w2, s2, fs, fsh,
            (w1, s1, w2, s2, fs, fsh) * num_plain_blocks, out]
    input_bn is pre-folded into wid/w1 of block 0; every Linear's following
    BatchNorm is pre-folded into (w, shift); fs/fsh is the block's final_bn.
    """
    x_ref = refs[0]
    wid, sid, w1, s1, w2, s2, fs, fsh = refs[1:9]
    o_ref = refs[-1]

    x = x_ref[...]                                             # (tm, 2Dp) bf16
    identity = jnp.dot(x, wid[...],
                       preferred_element_type=jnp.float32) + sid[...]
    h = jnp.maximum(
        jnp.dot(x, w1[...], preferred_element_type=jnp.float32) + s1[...], 0.0)
    y = jnp.dot(h.astype(COMPUTE_DTYPE), w2[...],
                preferred_element_type=jnp.float32) + s2[...] + identity
    y = y * fs[...] + fsh[...]                                 # final_bn

    off = 9
    for _ in range(num_plain_blocks):
        bw1, bs1, bw2, bs2, bfs, bfsh = refs[off:off + 6]
        off += 6
        xb = y.astype(COMPUTE_DTYPE)
        h = jnp.maximum(
            jnp.dot(xb, bw1[...], preferred_element_type=jnp.float32)
            + bs1[...], 0.0)
        y = jnp.dot(h.astype(COMPUTE_DTYPE), bw2[...],
                    preferred_element_type=jnp.float32) + bs2[...] + y
        y = y * bfs[...] + bfsh[...]                           # final_bn
    o_ref[...] = y.astype(o_ref.dtype)


def _target_branch_kernel(*refs, num_blocks):
    """Whole target branch (target_bn + ResNet blocks) for one E-row tile.

    refs = [emb, tbn_s, tbn_sh, (w1,s1,w2,s2,w3,s3,fs,fsh)*num_blocks, out]
    """
    emb_ref, ts, tsh = refs[0], refs[1], refs[2]
    o_ref = refs[-1]

    y = emb_ref[...] * ts[...] + tsh[...]                      # (tm, Dp) f32
    off = 3
    for _ in range(num_blocks):
        w1, s1, w2, s2, w3, s3, fs, fsh = refs[off:off + 8]
        off += 8
        xb = y.astype(COMPUTE_DTYPE)
        h = jnp.maximum(
            jnp.dot(xb, w1[...], preferred_element_type=jnp.float32)
            + s1[...], 0.0)
        h = jnp.maximum(
            jnp.dot(h.astype(COMPUTE_DTYPE), w2[...],
                    preferred_element_type=jnp.float32) + s2[...], 0.0)
        h = jnp.dot(h.astype(COMPUTE_DTYPE), w3[...],
                    preferred_element_type=jnp.float32) + s3[...]
        y = (h + y) * fs[...] + fsh[...]                       # final_bn
        y = jnp.maximum(y, 0.0)                                # block activation
    o_ref[...] = y.astype(o_ref.dtype)


def _score_kernel(x_ref, w_ref, b_ref, o_ref):
    """scores = x @ W + b, W already in (D, E) layout (no in-kernel transpose)."""
    y = jnp.dot(x_ref[...], w_ref[...], preferred_element_type=jnp.float32)
    o_ref[...] = (y + b_ref[...]).astype(o_ref.dtype)


# ----------------------------------------------------------------------------
# Parameter initialization (deterministic, synthetic — mirrors module shapes)
# ----------------------------------------------------------------------------
def init_linear(key, in_dim, out_dim):
    kw, kb = jax.random.split(key)
    w = jax.random.normal(kw, (out_dim, in_dim), jnp.float32) / jnp.sqrt(
        jnp.float32(in_dim))
    b = 0.01 * jax.random.normal(kb, (out_dim,), jnp.float32)
    return {"w_t": w.T, "b": b}          # stored transposed: (in, out)


def init_bn(key, dim):
    k1, k2, k3, k4 = jax.random.split(key, 4)
    return {
        "gamma": 1.0 + 0.1 * jax.random.normal(k1, (dim,), jnp.float32),
        "beta": 0.1 * jax.random.normal(k2, (dim,), jnp.float32),
        "mean": 0.1 * jax.random.normal(k3, (dim,), jnp.float32),
        "var": 1.0 + 0.1 * jnp.abs(jax.random.normal(k4, (dim,), jnp.float32)),
    }


def bn_affine(p, eps=1e-5):
    scale = p["gamma"] / jnp.sqrt(p["var"] + eps)
    shift = p["beta"] - p["mean"] * scale
    return scale.astype(jnp.float32), shift.astype(jnp.float32)


def init_deepe_params(key, num_emb, emb_dim, num_source_layers=5,
                      num_target_layers=1, inner_layers=3):
    del inner_layers  # target blocks use the module default of 3 linears
    keys = iter(jax.random.split(key, 256))
    params = {
        "emb": 0.1 * jax.random.normal(next(keys), (num_emb, emb_dim),
                                       jnp.float32),
        "b": jnp.zeros((num_emb,), jnp.float32),
        "input_bn": init_bn(next(keys), 2 * emb_dim),
        "target_bn": init_bn(next(keys), emb_dim),
        "source": [],
        "target": [],
    }
    # DeepEBlock(s) — layers=2 each
    for i in range(num_source_layers):
        in_dim = 2 * emb_dim if i == 0 else emb_dim
        blk = {
            "lin1": init_linear(next(keys), in_dim, emb_dim),
            "bn1": init_bn(next(keys), emb_dim),
            "lin2": init_linear(next(keys), emb_dim, emb_dim),
            "bn2": init_bn(next(keys), emb_dim),
            "final_bn": init_bn(next(keys), emb_dim),
        }
        if in_dim != emb_dim:
            blk["dim_map"] = init_linear(next(keys), in_dim, emb_dim)
            blk["identity_bn"] = init_bn(next(keys), emb_dim)
        params["source"].append(blk)
    # ResNetBlock(s) — layers=3: Lin/BN/ReLU, Lin/BN/ReLU, Lin/BN
    for _ in range(num_target_layers):
        blk = {
            "lin1": init_linear(next(keys), emb_dim, emb_dim),
            "bn1": init_bn(next(keys), emb_dim),
            "lin2": init_linear(next(keys), emb_dim, emb_dim),
            "bn2": init_bn(next(keys), emb_dim),
            "lin3": init_linear(next(keys), emb_dim, emb_dim),
            "bn3": init_bn(next(keys), emb_dim),
            "final_bn": init_bn(next(keys), emb_dim),
        }
        params["target"].append(blk)
    return params


# ----------------------------------------------------------------------------
# One-time parameter preparation: fold eval-mode BN into Linear, pad feature
# dims to multiples of 128, cast weights to bf16.
# ----------------------------------------------------------------------------
def fold_linear_bn(lin, bn):
    """(x @ w_t + b) followed by BN  ==  x @ w_eff + shift_eff   (f32 fold)."""
    s, sh = bn_affine(bn)
    w = lin["w_t"] * s[None, :]
    b = lin["b"] * s + sh
    return w, b


def fold_input_affine(w, b, s_in, sh_in):
    """(x*s_in + sh_in) @ w + b  ==  x @ (diag(s_in) w) + (sh_in @ w + b)."""
    return s_in[:, None] * w, sh_in @ w + b


def _pad2(w, r, c):
    out = jnp.zeros((r, c), w.dtype)
    return out.at[:w.shape[0], :w.shape[1]].set(w)


def _pad_vec_row(v, n):
    out = jnp.zeros((n,), jnp.float32)
    return out.at[:v.shape[0]].set(v.astype(jnp.float32)).reshape(1, n)


def _pad_concat_in(w, d, dp, dout_p):
    """Pad a (2*d, dout) weight so it matches the padded [emb|emb] concat."""
    out = jnp.zeros((2 * dp, dout_p), w.dtype)
    out = out.at[:d, :w.shape[1]].set(w[:d])
    out = out.at[dp:dp + d, :w.shape[1]].set(w[d:])
    return out


def prepare_inference_params(params):
    emb = params["emb"].astype(jnp.float32)
    E, D = emb.shape
    Dp = _round_up(D, 128)

    prep = {
        "Dp": Dp,
        "num_plain_source": len(params["source"]) - 1,
        "num_target": len(params["target"]),
        "emb_pad": _pad2(emb, E, Dp),                 # (E, Dp) f32
        "b": params["b"].astype(jnp.float32),         # (E,)
    }

    s_in, sh_in = bn_affine(params["input_bn"])       # (2D,)

    # --- source block 0 (has dim_map; input dim 2D; input_bn folded in) ---
    blk = params["source"][0]
    wid, sid = fold_linear_bn(blk["dim_map"], blk["identity_bn"])
    wid, sid = fold_input_affine(wid, sid, s_in, sh_in)
    w1, s1 = fold_linear_bn(blk["lin1"], blk["bn1"])
    w1, s1 = fold_input_affine(w1, s1, s_in, sh_in)
    w2, s2 = fold_linear_bn(blk["lin2"], blk["bn2"])
    fs, fsh = bn_affine(blk["final_bn"])
    src_args = [
        _pad_concat_in(wid, D, Dp, Dp).astype(COMPUTE_DTYPE), _pad_vec_row(sid, Dp),
        _pad_concat_in(w1, D, Dp, Dp).astype(COMPUTE_DTYPE), _pad_vec_row(s1, Dp),
        _pad2(w2, Dp, Dp).astype(COMPUTE_DTYPE), _pad_vec_row(s2, Dp),
        _pad_vec_row(fs, Dp), _pad_vec_row(fsh, Dp),
    ]
    # --- remaining source blocks (plain skip) ---
    for blk in params["source"][1:]:
        w1, s1 = fold_linear_bn(blk["lin1"], blk["bn1"])
        w2, s2 = fold_linear_bn(blk["lin2"], blk["bn2"])
        fs, fsh = bn_affine(blk["final_bn"])
        src_args += [
            _pad2(w1, Dp, Dp).astype(COMPUTE_DTYPE), _pad_vec_row(s1, Dp),
            _pad2(w2, Dp, Dp).astype(COMPUTE_DTYPE), _pad_vec_row(s2, Dp),
            _pad_vec_row(fs, Dp), _pad_vec_row(fsh, Dp),
        ]
    prep["source_args"] = src_args

    # --- target branch ---
    ts, tsh = bn_affine(params["target_bn"])
    tgt_args = [_pad_vec_row(ts, Dp), _pad_vec_row(tsh, Dp)]
    for blk in params["target"]:
        w1, s1 = fold_linear_bn(blk["lin1"], blk["bn1"])
        w2, s2 = fold_linear_bn(blk["lin2"], blk["bn2"])
        w3, s3 = fold_linear_bn(blk["lin3"], blk["bn3"])
        fs, fsh = bn_affine(blk["final_bn"])
        tgt_args += [
            _pad2(w1, Dp, Dp).astype(COMPUTE_DTYPE), _pad_vec_row(s1, Dp),
            _pad2(w2, Dp, Dp).astype(COMPUTE_DTYPE), _pad_vec_row(s2, Dp),
            _pad2(w3, Dp, Dp).astype(COMPUTE_DTYPE), _pad_vec_row(s3, Dp),
            _pad_vec_row(fs, Dp), _pad_vec_row(fsh, Dp),
        ]
    prep["target_args"] = tgt_args
    return prep


# ----------------------------------------------------------------------------
# Forward pass (dropout layers are identity in eval mode)
# ----------------------------------------------------------------------------
def source_branch_forward(x_bf16, prep):
    """One fused pallas_call for the whole source branch; weights resident."""
    B, K = x_bf16.shape
    Dp = prep["Dp"]
    tm = _row_tile(B)
    args = prep["source_args"]
    in_specs = [pl.BlockSpec((tm, K), lambda i: (i, 0))]
    for a in args:
        in_specs.append(pl.BlockSpec(a.shape, lambda i: (0, 0)))   # resident
    kernel = functools.partial(_source_branch_kernel,
                               num_plain_blocks=prep["num_plain_source"])
    return pl.pallas_call(
        kernel,
        out_shape=jax.ShapeDtypeStruct((B, Dp), COMPUTE_DTYPE),
        grid=(pl.cdiv(B, tm),),
        in_specs=in_specs,
        out_specs=pl.BlockSpec((tm, Dp), lambda i: (i, 0)),
        compiler_params=_CP_ROWS,
    )(x_bf16, *args)


def target_branch_forward(prep):
    """One fused pallas_call for the whole target branch over the emb table."""
    E, Dp = prep["emb_pad"].shape
    tm = _row_tile(E)
    args = prep["target_args"]
    in_specs = [pl.BlockSpec((tm, Dp), lambda i: (i, 0))]
    for a in args:
        in_specs.append(pl.BlockSpec(a.shape, lambda i: (0, 0)))   # resident
    kernel = functools.partial(_target_branch_kernel,
                               num_blocks=prep["num_target"])
    return pl.pallas_call(
        kernel,
        out_shape=jax.ShapeDtypeStruct((E, Dp), COMPUTE_DTYPE),
        grid=(pl.cdiv(E, tm),),
        in_specs=in_specs,
        out_specs=pl.BlockSpec((tm, Dp), lambda i: (i, 0)),
        compiler_params=_CP_ROWS,
    )(prep["emb_pad"], *args)


def compute_target_weight(prep):
    """Batch-independent target branch; cached across queries.

    Returns the transformed table already transposed to (Dp, E) so the score
    matmul uses the standard K-on-sublane / E-on-lane layout.
    """
    w = target_branch_forward(prep)          # (E, Dp) bf16
    # TODO(synk): optional weight-only quantization of this cached table
    # (fp8 on v7x, int8 on v5e/v6e) to halve HBM bytes on the score matmul.
    return jnp.transpose(w)                  # (Dp, E) bf16 — one-time cost


def score_forward(x_bf16, w_t, bias):
    """scores = x @ W + b with lane-dense (tm, tn) output tiles."""
    B, Dp = x_bf16.shape
    _, E = w_t.shape
    tm = _row_tile(B)
    tn = E if E <= TN_SCORE else TN_SCORE
    grid = (pl.cdiv(B, tm), pl.cdiv(E, tn))   # j (over E) carries the work
    return pl.pallas_call(
        _score_kernel,
        out_shape=jax.ShapeDtypeStruct((B, E), jnp.float32),
        grid=grid,
        in_specs=[
            pl.BlockSpec((tm, Dp), lambda i, j: (i, 0)),
            pl.BlockSpec((Dp, tn), lambda i, j: (0, j)),
            pl.BlockSpec((1, tn), lambda i, j: (0, j)),
        ],
        out_specs=pl.BlockSpec((tm, tn), lambda i, j: (i, j)),
        compiler_params=_CP_2D,
    )(x_bf16, w_t, bias.reshape(1, E))


def deepe_forward(prep, e1, rel, target_weight_t=None):
    if target_weight_t is None:
        target_weight_t = compute_target_weight(prep)
    emb = prep["emb_pad"]                                    # (E, Dp) f32
    # Embedding gather + concat (tiny, done with XLA ops); input_bn is folded
    # into the first source block's weights; input_drop = identity in eval.
    x = jnp.concatenate([emb[e1], emb[rel]], axis=-1).astype(COMPUTE_DTYPE)
    x = source_branch_forward(x, prep)                       # (B, Dp) bf16
    return score_forward(x, target_weight_t, prep["b"])      # (B, E) f32


# TODO(synk): training-mode dropout / BatchNorm statistic updates and the
# CrossEntropyLoss head are not part of the forward kernel (inference only).


# ----------------------------------------------------------------------------
# Pure-f32 JAX reference (faithful eval-mode semantics, unfolded, unpadded)
# ----------------------------------------------------------------------------
def deepe_reference(params, e1, rel):
    def bn(x, p):
        s, sh = bn_affine(p)
        return x * s[None, :] + sh[None, :]

    emb = params["emb"]
    x = jnp.concatenate([emb[e1], emb[rel]], axis=-1)
    x = bn(x, params["input_bn"])
    for blk in params["source"]:
        if "dim_map" in blk:
            identity = bn(x @ blk["dim_map"]["w_t"] + blk["dim_map"]["b"],
                          blk["identity_bn"])
        else:
            identity = x
        h = jnp.maximum(bn(x @ blk["lin1"]["w_t"] + blk["lin1"]["b"],
                           blk["bn1"]), 0.0)
        r = bn(h @ blk["lin2"]["w_t"] + blk["lin2"]["b"], blk["bn2"])
        x = bn(identity + r, blk["final_bn"])
    w = bn(emb, params["target_bn"])
    for blk in params["target"]:
        h = jnp.maximum(bn(w @ blk["lin1"]["w_t"] + blk["lin1"]["b"],
                           blk["bn1"]), 0.0)
        h = jnp.maximum(bn(h @ blk["lin2"]["w_t"] + blk["lin2"]["b"],
                           blk["bn2"]), 0.0)
        h = bn(h @ blk["lin3"]["w_t"] + blk["lin3"]["b"], blk["bn3"])
        w = jnp.maximum(bn(w + h, blk["final_bn"]), 0.0)
    return x @ w.T + params["b"][None, :]


# ----------------------------------------------------------------------------
if __name__ == "__main__":
    NUM_EMB = 64
    EMB_DIM = 32
    BATCH = 8

    key = jax.random.PRNGKey(0)
    kp, ke, kr = jax.random.split(key, 3)
    params = init_deepe_params(kp, NUM_EMB, EMB_DIM,
                               num_source_layers=5, num_target_layers=1,
                               inner_layers=3)
    prep = prepare_inference_params(params)
    e1 = jax.random.randint(ke, (BATCH,), 0, NUM_EMB, dtype=jnp.int32)
    rel = jax.random.randint(kr, (BATCH,), 0, NUM_EMB, dtype=jnp.int32)

    # Batch-independent target branch: computed once, reused across queries.
    target_weight_t = jax.block_until_ready(compute_target_weight(prep))

    pred = deepe_forward(prep, e1, rel, target_weight_t=target_weight_t)
    pred = jax.block_until_ready(pred)
    assert pred.shape == (BATCH, NUM_EMB) and pred.dtype == jnp.float32
    assert bool(jnp.all(jnp.isfinite(pred)))

    # End-to-end tolerance check vs. a pure-f32 JAX reference (bf16 weight /
    # activation streams introduce only small relative error).
    ref = deepe_reference(params, e1, rel)
    denom = jnp.maximum(1.0, jnp.max(jnp.abs(ref)))
    err = float(jnp.max(jnp.abs(pred - ref)) / denom)
    assert err < 0.1, f"mismatch vs f32 reference: rel-err={err}"

    print("KERNEL_OK")
</pallas_src>

<mosaic_0001>
module attributes {stable_mosaic.version = 11 : i64} {
  func.func @_target_branch_kernel(%arg0: i32, %arg1: memref<64x128xf32, #tpu.memory_space<vmem>>, %arg2: memref<1x128xf32, #tpu.memory_space<vmem>>, %arg3: memref<1x128xf32, #tpu.memory_space<vmem>>, %arg4: memref<128x128xbf16, #tpu.memory_space<vmem>>, %arg5: memref<1x128xf32, #tpu.memory_space<vmem>>, %arg6: memref<128x128xbf16, #tpu.memory_space<vmem>>, %arg7: memref<1x128xf32, #tpu.memory_space<vmem>>, %arg8: memref<128x128xbf16, #tpu.memory_space<vmem>>, %arg9: memref<1x128xf32, #tpu.memory_space<vmem>>, %arg10: memref<1x128xf32, #tpu.memory_space<vmem>>, %arg11: memref<1x128xf32, #tpu.memory_space<vmem>>, %arg12: memref<64x128xbf16, #tpu.memory_space<vmem>>) attributes {dimension_semantics = [#tpu.dimension_semantics<parallel>], iteration_bounds = array<i64: 1>, scalar_prefetch = 0 : i64, scratch_operands = 0 : i64, tpu.core_type = #tpu.core_type<tc>, window_params = [{transform_indices = @transform_0, window_bounds = array<i64: 64, 128>}, {pipeline_mode = #tpu.pipeline_mode<synchronous>, transform_indices = @transform_1, window_bounds = array<i64: 1, 128>}, {pipeline_mode = #tpu.pipeline_mode<synchronous>, transform_indices = @transform_2, window_bounds = array<i64: 1, 128>}, {pipeline_mode = #tpu.pipeline_mode<synchronous>, transform_indices = @transform_3, window_bounds = array<i64: 128, 128>}, {pipeline_mode = #tpu.pipeline_mode<synchronous>, transform_indices = @transform_4, window_bounds = array<i64: 1, 128>}, {pipeline_mode = #tpu.pipeline_mode<synchronous>, transform_indices = @transform_5, window_bounds = array<i64: 128, 128>}, {pipeline_mode = #tpu.pipeline_mode<synchronous>, transform_indices = @transform_6, window_bounds = array<i64: 1, 128>}, {pipeline_mode = #tpu.pipeline_mode<synchronous>, transform_indices = @transform_7, window_bounds = array<i64: 128, 128>}, {pipeline_mode = #tpu.pipeline_mode<synchronous>, transform_indices = @transform_8, window_bounds = array<i64: 1, 128>}, {pipeline_mode = #tpu.pipeline_mode<synchronous>, transform_indices = @transform_9, window_bounds = array<i64: 1, 128>}, {pipeline_mode = #tpu.pipeline_mode<synchronous>, transform_indices = @transform_10, window_bounds = array<i64: 1, 128>}, {transform_indices = @transform_11, window_bounds = array<i64: 64, 128>}]} {
    %c0 = arith.constant 0 : index
    %c0_0 = arith.constant 0 : index
    %0 = vector.load %arg1[%c0, %c0_0] : memref<64x128xf32, #tpu.memory_space<vmem>>, vector<64x128xf32>
    %c0_1 = arith.constant 0 : index
    %c0_2 = arith.constant 0 : index
    %1 = vector.load %arg2[%c0_1, %c0_2] : memref<1x128xf32, #tpu.memory_space<vmem>>, vector<1x128xf32>
    %2 = vector.broadcast %1 : vector<1x128xf32> to vector<64x128xf32>
    %3 = arith.mulf %0, %2 : vector<64x128xf32>
    %c0_3 = arith.constant 0 : index
    %c0_4 = arith.constant 0 : index
    %4 = vector.load %arg3[%c0_3, %c0_4] : memref<1x128xf32, #tpu.memory_space<vmem>>, vector<1x128xf32>
    %5 = vector.broadcast %4 : vector<1x128xf32> to vector<64x128xf32>
    %6 = arith.addf %3, %5 : vector<64x128xf32>
    %7 = arith.truncf %6 : vector<64x128xf32> to vector<64x128xbf16>
    %c0_5 = arith.constant 0 : index
    %c0_6 = arith.constant 0 : index
    %8 = vector.load %arg4[%c0_5, %c0_6] : memref<128x128xbf16, #tpu.memory_space<vmem>>, vector<128x128xbf16>
    %cst = arith.constant dense<0.000000e+00> : vector<64x128xf32>
    %9 = tpu.matmul %7, %8, %cst {dimension_numbers = #tpu.dot_dimension_numbers<[1], [0], [0], [1], [0, 0, 1, 1], [], []>} : vector<64x128xbf16>, vector<128x128xbf16>, vector<64x128xf32> -> vector<64x128xf32>
    %c0_7 = arith.constant 0 : index
    %c0_8 = arith.constant 0 : index
    %10 = vector.load %arg5[%c0_7, %c0_8] : memref<1x128xf32, #tpu.memory_space<vmem>>, vector<1x128xf32>
    %11 = vector.broadcast %10 : vector<1x128xf32> to vector<64x128xf32>
    %12 = arith.addf %9, %11 : vector<64x128xf32>
    %cst_9 = arith.constant 0.000000e+00 : f32
    %13 = vector.broadcast %cst_9 : f32 to vector<64x128xf32>
    %14 = arith.maximumf %12, %13 : vector<64x128xf32>
    %15 = arith.truncf %14 : vector<64x128xf32> to vector<64x128xbf16>
    %c0_10 = arith.constant 0 : index
    %c0_11 = arith.constant 0 : index
    %16 = vector.load %arg6[%c0_10, %c0_11] : memref<128x128xbf16, #tpu.memory_space<vmem>>, vector<128x128xbf16>
    %cst_12 = arith.constant dense<0.000000e+00> : vector<64x128xf32>
    %17 = tpu.matmul %15, %16, %cst_12 {dimension_numbers = #tpu.dot_dimension_numbers<[1], [0], [0], [1], [0, 0, 1, 1], [], []>} : vector<64x128xbf16>, vector<128x128xbf16>, vector<64x128xf32> -> vector<64x128xf32>
    %c0_13 = arith.constant 0 : index
    %c0_14 = arith.constant 0 : index
    %18 = vector.load %arg7[%c0_13, %c0_14] : memref<1x128xf32, #tpu.memory_space<vmem>>, vector<1x128xf32>
    %19 = vector.broadcast %18 : vector<1x128xf32> to vector<64x128xf32>
    %20 = arith.addf %17, %19 : vector<64x128xf32>
    %cst_15 = arith.constant 0.000000e+00 : f32
    %21 = vector.broadcast %cst_15 : f32 to vector<64x128xf32>
    %22 = arith.maximumf %20, %21 : vector<64x128xf32>
    %23 = arith.truncf %22 : vector<64x128xf32> to vector<64x128xbf16>
    %c0_16 = arith.constant 0 : index
    %c0_17 = arith.constant 0 : index
    %24 = vector.load %arg8[%c0_16, %c0_17] : memref<128x128xbf16, #tpu.memory_space<vmem>>, vector<128x128xbf16>
    %cst_18 = arith.constant dense<0.000000e+00> : vector<64x128xf32>
    %25 = tpu.matmul %23, %24, %cst_18 {dimension_numbers = #tpu.dot_dimension_numbers<[1], [0], [0], [1], [0, 0, 1, 1], [], []>} : vector<64x128xbf16>, vector<128x128xbf16>, vector<64x128xf32> -> vector<64x128xf32>
    %c0_19 = arith.constant 0 : index
    %c0_20 = arith.constant 0 : index
    %26 = vector.load %arg9[%c0_19, %c0_20] : memref<1x128xf32, #tpu.memory_space<vmem>>, vector<1x128xf32>
    %27 = vector.broadcast %26 : vector<1x128xf32> to vector<64x128xf32>
    %28 = arith.addf %25, %27 : vector<64x128xf32>
    %29 = arith.addf %28, %6 : vector<64x128xf32>
    %c0_21 = arith.constant 0 : index
    %c0_22 = arith.constant 0 : index
    %30 = vector.load %arg10[%c0_21, %c0_22] : memref<1x128xf32, #tpu.memory_space<vmem>>, vector<1x128xf32>
    %31 = vector.broadcast %30 : vector<1x128xf32> to vector<64x128xf32>
    %32 = arith.mulf %29, %31 : vector<64x128xf32>
    %c0_23 = arith.constant 0 : index
    %c0_24 = arith.constant 0 : index
    %33 = vector.load %arg11[%c0_23, %c0_24] : memref<1x128xf32, #tpu.memory_space<vmem>>, vector<1x128xf32>
    %34 = vector.broadcast %33 : vector<1x128xf32> to vector<64x128xf32>
    %35 = arith.addf %32, %34 : vector<64x128xf32>
    %cst_25 = arith.constant 0.000000e+00 : f32
    %36 = vector.broadcast %cst_25 : f32 to vector<64x128xf32>
    %37 = arith.maximumf %35, %36 : vector<64x128xf32>
    %38 = arith.truncf %37 : vector<64x128xf32> to vector<64x128xbf16>
    %c0_26 = arith.constant 0 : index
    %c0_27 = arith.constant 0 : index
    %39 = vector.load %arg12[%c0_26, %c0_27] : memref<64x128xbf16, #tpu.memory_space<vmem>>, vector<64x128xbf16>
    tpu.vector_store %arg12[%c0_26, %c0_27], %38 {strides = array<i32>} : memref<64x128xbf16, #tpu.memory_space<vmem>>, vector<64x128xbf16>,
    return
  }
  func.func @transform_0(%arg0: i32) -> (i32, i32) {
    %c0_i32 = arith.constant 0 : i32
    %c0_i32_0 = arith.constant 0 : i32
    return %arg0, %c0_i32 : i32, i32
  }
  func.func @transform_1(%arg0: i32) -> (i32, i32) {
    %c0_i32 = arith.constant 0 : i32
    %c0_i32_0 = arith.constant 0 : i32
    %c0_i32_1 = arith.constant 0 : i32
    return %c0_i32, %c0_i32_0 : i32, i32
  }
  func.func @transform_2(%arg0: i32) -> (i32, i32) {
    %c0_i32 = arith.constant 0 : i32
    %c0_i32_0 = arith.constant 0 : i32
    %c0_i32_1 = arith.constant 0 : i32
    return %c0_i32, %c0_i32_0 : i32, i32
  }
  func.func @transform_3(%arg0: i32) -> (i32, i32) {
    %c0_i32 = arith.constant 0 : i32
    %c0_i32_0 = arith.constant 0 : i32
    %c0_i32_1 = arith.constant 0 : i32
    return %c0_i32, %c0_i32_0 : i32, i32
  }
  func.func @transform_4(%arg0: i32) -> (i32, i32) {
    %c0_i32 = arith.constant 0 : i32
    %c0_i32_0 = arith.constant 0 : i32
    %c0_i32_1 = arith.constant 0 : i32
    return %c0_i32, %c0_i32_0 : i32, i32
  }
  func.func @transform_5(%arg0: i32) -> (i32, i32) {
    %c0_i32 = arith.constant 0 : i32
    %c0_i32_0 = arith.constant 0 : i32
    %c0_i32_1 = arith.constant 0 : i32
    return %c0_i32, %c0_i32_0 : i32, i32
  }
  func.func @transform_6(%arg0: i32) -> (i32, i32) {
    %c0_i32 = arith.constant 0 : i32
    %c0_i32_0 = arith.constant 0 : i32
    %c0_i32_1 = arith.constant 0 : i32
    return %c0_i32, %c0_i32_0 : i32, i32
  }
  func.func @transform_7(%arg0: i32) -> (i32, i32) {
    %c0_i32 = arith.constant 0 : i32
    %c0_i32_0 = arith.constant 0 : i32
    %c0_i32_1 = arith.constant 0 : i32
    return %c0_i32, %c0_i32_0 : i32, i32
  }
  func.func @transform_8(%arg0: i32) -> (i32, i32) {
    %c0_i32 = arith.constant 0 : i32
    %c0_i32_0 = arith.constant 0 : i32
    %c0_i32_1 = arith.constant 0 : i32
    return %c0_i32, %c0_i32_0 : i32, i32
  }
  func.func @transform_9(%arg0: i32) -> (i32, i32) {
    %c0_i32 = arith.constant 0 : i32
    %c0_i32_0 = arith.constant 0 : i32
    %c0_i32_1 = arith.constant 0 : i32
    return %c0_i32, %c0_i32_0 : i32, i32
  }
  func.func @transform_10(%arg0: i32) -> (i32, i32) {
    %c0_i32 = arith.constant 0 : i32
    %c0_i32_0 = arith.constant 0 : i32
    %c0_i32_1 = arith.constant 0 : i32
    return %c0_i32, %c0_i32_0 : i32, i32
  }
  func.func @transform_11(%arg0: i32) -> (i32, i32) {
    %c0_i32 = arith.constant 0 : i32
    %c0_i32_0 = arith.constant 0 : i32
    return %arg0, %c0_i32 : i32, i32
  }
}

</mosaic_0001>

<llo_original>
// kernel: tpu_custom_call.1
$region0: #{tpu_custom_call.1}
  #allocation0 [shape = 'u32[]', space=smem, size = 0x4, offset = 0x4, fixed_abs, tag = 'smem constant byte address 0x4 - core index']
  #allocation1 [shape = 'u32[72,128]{1,0:T(1,128)}', space=vmem, size = 0x9000, scoped, tag = 'internal scratch']
  %s0 = inlined_call_operand.hbm [shape: f32[64,128], index: 0, kind: input, shape index: {}]
  %s1 = inlined_call_operand.hbm [shape: f32[1,128], index: 1, kind: input, shape index: {}]
  %s2 = inlined_call_operand.vmem [shape: f32[1,128], index: 2, kind: input, shape index: {}]
  %s3 = inlined_call_operand.hbm [shape: bf16[128,128], index: 3, kind: input, shape index: {}]
  %s4 = inlined_call_operand.vmem [shape: f32[1,128], index: 4, kind: input, shape index: {}]
  %s5 = inlined_call_operand.hbm [shape: bf16[128,128], index: 5, kind: input, shape index: {}]
  %s6 = inlined_call_operand.vmem [shape: f32[1,128], index: 6, kind: input, shape index: {}]
  %s7 = inlined_call_operand.hbm [shape: bf16[128,128], index: 7, kind: input, shape index: {}]
  %s8 = inlined_call_operand.vmem [shape: f32[1,128], index: 8, kind: input, shape index: {}]
  %s9 = inlined_call_operand.vmem [shape: f32[1,128], index: 9, kind: input, shape index: {}]
  %s10 = inlined_call_operand.vmem [shape: f32[1,128], index: 10, kind: input, shape index: {}]
  %s11 = inlined_call_operand.hbm [shape: bf16[64,128], index: 11, kind: output, shape index: {}]
  %s12 = sld [smem:[#allocation0]]
  $region74: #{tpu_custom_call.1} parent=0
    _
  %s14 = ssub.s32 1, %s12
  %s15 = scalar_select 0, %s14, %s12
  $region1: #{tpu_custom_call.1} parent=0
    #allocation2 [shape = 'u8[32768]{0}', space=vmem, size = 0x8000, scoped, tag = 'input window, operand 0, single buffered']
    #allocation3 [shape = 's32[1]{0}', space=sflag, size = 0x4, scoped, tag = 'scoped memory for tpu_custom_call.1']
    #allocation4 [shape = 's32[1]{0}', space=sflag, size = 0x4, scoped, tag = 'scoped memory for tpu_custom_call.1']
    #allocation5 [shape = 'u8[512]{0}', space=vmem, size = 0x400, scoped, tag = 'input window, operand 1, single buffered']
    #allocation6 [shape = 's32[1]{0}', space=sflag, size = 0x4, scoped, tag = 'scoped memory for tpu_custom_call.1']
    #allocation7 [shape = 'u8[32768]{0}', space=vmem, size = 0x8000, scoped, tag = 'input window, operand 3, single buffered']
    #allocation8 [shape = 'u8[32768]{0}', space=vmem, size = 0x8000, scoped, tag = 'input window, operand 5, single buffered']
    #allocation9 [shape = 's32[1]{0}', space=sflag, size = 0x4, scoped, tag = 'scoped memory for tpu_custom_call.1']
    #allocation10 [shape = 'u8[32768]{0}', space=vmem, size = 0x8000, scoped, tag = 'input window, operand 7, single buffered']
    #allocation11 [shape = 'u8[16384]{0}', space=vmem, size = 0x4000, scoped, tag = 'output window, operand 0, single buffered']
    %16 = vsyncpa [#allocation3], 0
    %17 = vsyncpa [#allocation6], 0
    %18 = vsyncpa [#allocation9], 0
    %19 = vsyncpa [#allocation4], 0
    // Predicated region
    $region2: #{tpu_custom_call.1} parent=1 // pred_check
      _
    $region3: #{tpu_custom_call.1} parent=1 // pred_check_branch
      %21 = sbr.rel (0) target = $region5
    $region4: #{tpu_custom_call.1} parent=1 // pred_region
      %23 = vsyncadd [#allocation3], 0
      %s24 = sshll.u32 %s0, 4
      %s25 = int_to_ptr.hbm [resolvable:$true] %s24
      %s26 = sshll.u32 [#allocation2], 4
      %s27 = int_to_ptr.vmem [resolvable:$true] %s26
      %32 = dma.hbm_to_vmem [thread:$0]  %s25, 1024, %s27, [#allocation3], 128, 128, 8
    $region5: #{tpu_custom_call.1} parent=1 // pred_fallthru
      _
    // Predicated region
    $region6: #{tpu_custom_call.1} parent=1 // pred_check
      _
    $region7: #{tpu_custom_call.1} parent=1 // pred_check_branch
      %34 = sbr.rel (0) target = $region9
    $region8: #{tpu_custom_call.1} parent=1 // pred_region
      %36 = vsyncadd [#allocation6], 0
      %s38 = sshll.u32 %s1, 4
      %s39 = int_to_ptr.hbm [resolvable:$true] %s38
      %s40 = sshll.u32 [#allocation5], 4
      %s41 = int_to_ptr.vmem [resolvable:$true] %s40
      %43 = dma.hbm_to_vmem [thread:$0]  %s39, 16, %s41, [#allocation6]
    $region9: #{tpu_custom_call.1} parent=1 // pred_fallthru
      _
    // Predicated region
    $region10: #{tpu_custom_call.1} parent=1 // pred_check
      _
    $region11: #{tpu_custom_call.1} parent=1 // pred_check_branch
      %45 = sbr.rel (0) target = $region13
    $region12: #{tpu_custom_call.1} parent=1 // pred_region
      _
    $region13: #{tpu_custom_call.1} parent=1 // pred_fallthru
      _
    // Predicated region
    $region14: #{tpu_custom_call.1} parent=1 // pred_check
      _
    $region15: #{tpu_custom_call.1} parent=1 // pred_check_branch
      %47 = sbr.rel (0) target = $region17
    $region16: #{tpu_custom_call.1} parent=1 // pred_region
      %49 = vsyncadd [#allocation6], 0
      %s50 = sshll.u32 %s3, 4
      %s51 = int_to_ptr.hbm [resolvable:$true] %s50
      %s52 = sshll.u32 [#allocation7], 4
      %s53 = int_to_ptr.vmem [resolvable:$true] %s52
      %58 = dma.hbm_to_vmem [thread:$0]  %s51, 1024, %s53, [#allocation6], 64, 64, 4
    $region17: #{tpu_custom_call.1} parent=1 // pred_fallthru
      _
    // Predicated region
    $region18: #{tpu_custom_call.1} parent=1 // pred_check
      _
    $region19: #{tpu_custom_call.1} parent=1 // pred_check_branch
      %60 = sbr.rel (0) target = $region21
    $region20: #{tpu_custom_call.1} parent=1 // pred_region
      _
    $region21: #{tpu_custom_call.1} parent=1 // pred_fallthru
      _
    // Predicated region
    $region22: #{tpu_custom_call.1} parent=1 // pred_check
      _
    $region23: #{tpu_custom_call.1} parent=1 // pred_check_branch
      %62 = sbr.rel (0) target = $region25
    $region24: #{tpu_custom_call.1} parent=1 // pred_region
      %64 = vsyncadd [#allocation9], 0
      %s65 = sshll.u32 %s5, 4
      %s66 = int_to_ptr.hbm [resolvable:$true] %s65
      %s67 = sshll.u32 [#allocation8], 4
      %s68 = int_to_ptr.vmem [resolvable:$true] %s67
      %73 = dma.hbm_to_vmem [thread:$0]  %s66, 1024, %s68, [#allocation9], 64, 64, 4
    $region25: #{tpu_custom_call.1} parent=1 // pred_fallthru
      _
    // Predicated region
    $region26: #{tpu_custom_call.1} parent=1 // pred_check
      _
    $region27: #{tpu_custom_call.1} parent=1 // pred_check_branch
      %75 = sbr.rel (0) target = $region29
    $region28: #{tpu_custom_call.1} parent=1 // pred_region
      _
    $region29: #{tpu_custom_call.1} parent=1 // pred_fallthru
      _
    // Predicated region
    $region30: #{tpu_custom_call.1} parent=1 // pred_check
      _
    $region31: #{tpu_custom_call.1} parent=1 // pred_check_branch
      %77 = sbr.rel (0) target = $region33
    $region32: #{tpu_custom_call.1} parent=1 // pred_region
      %79 = vsyncadd [#allocation9], 0
      %s80 = sshll.u32 %s7, 4
      %s81 = int_to_ptr.hbm [resolvable:$true] %s80
      %s82 = sshll.u32 [#allocation10], 4
      %s83 = int_to_ptr.vmem [resolvable:$true] %s82
      %88 = dma.hbm_to_vmem [thread:$0]  %s81, 1024, %s83, [#allocation9], 64, 64, 4
    $region33: #{tpu_custom_call.1} parent=1 // pred_fallthru
      _
    // Predicated region
    $region34: #{tpu_custom_call.1} parent=1 // pred_check
      _
    $region35: #{tpu_custom_call.1} parent=1 // pred_check_branch
      %90 = sbr.rel (0) target = $region37
    $region36: #{tpu_custom_call.1} parent=1 // pred_region
      _
    $region37: #{tpu_custom_call.1} parent=1 // pred_fallthru
      _
    // Predicated region
    $region38: #{tpu_custom_call.1} parent=1 // pred_check
      _
    $region39: #{tpu_custom_call.1} parent=1 // pred_check_branch
      %92 = sbr.rel (0) target = $region41
    $region40: #{tpu_custom_call.1} parent=1 // pred_region
      _
    $region41: #{tpu_custom_call.1} parent=1 // pred_fallthru
      _
    // Predicated region
    $region42: #{tpu_custom_call.1} parent=1 // pred_check
      _
    $region43: #{tpu_custom_call.1} parent=1 // pred_check_branch
      %94 = sbr.rel (0) target = $region45
    $region44: #{tpu_custom_call.1} parent=1 // pred_region
      _
    $region45: #{tpu_custom_call.1} parent=1 // pred_fallthru
      _
    // Predicated region
    $region46: #{tpu_custom_call.1} parent=1 // pred_check
      _
    $region47: #{tpu_custom_call.1} parent=1 // pred_check_branch
      %96 = sbr.rel (0) target = $region49
    $region48: #{tpu_custom_call.1} parent=1 // pred_region
      %98 = dma.done [#allocation3], 1024
    $region49: #{tpu_custom_call.1} parent=1 // pred_fallthru
      _
    // Predicated region
    $region50: #{tpu_custom_call.1} parent=1 // pred_check
      _
    $region51: #{tpu_custom_call.1} parent=1 // pred_check_branch
      %100 = sbr.rel (0) target = $region53
    $region52: #{tpu_custom_call.1} parent=1 // pred_region
      %102 = dma.done [#allocation6], 16
    $region53: #{tpu_custom_call.1} parent=1 // pred_fallthru
      _
    // Predicated region
    $region54: #{tpu_custom_call.1} parent=1 // pred_check
      _
    $region55: #{tpu_custom_call.1} parent=1 // pred_check_branch
      %104 = sbr.rel (0) target = $region57
    $region56: #{tpu_custom_call.1} parent=1 // pred_region
      %106 = dma.done [#allocation6], 1024
    $region57: #{tpu_custom_call.1} parent=1 // pred_fallthru
      _
    // Predicated region
    $region58: #{tpu_custom_call.1} parent=1 // pred_check
      _
    $region59: #{tpu_custom_call.1} parent=1 // pred_check_branch
      %108 = sbr.rel (0) target = $region61
    $region60: #{tpu_custom_call.1} parent=1 // pred_region
      %110 = dma.done [#allocation9], 1024
    $region61: #{tpu_custom_call.1} parent=1 // pred_fallthru
      _
    // Predicated region
    $region62: #{tpu_custom_call.1} parent=1 // pred_check
      _
    $region63: #{tpu_custom_call.1} parent=1 // pred_check_branch
      %112 = sbr.rel (0) target = $region65
    $region64: #{tpu_custom_call.1} parent=1 // pred_region
      %114 = dma.done [#allocation9], 1024
    $region65: #{tpu_custom_call.1} parent=1 // pred_fallthru
      _
    %v115 = vld [vmem:[#allocation2] sm:$0xff]
    %v116 = vld [vmem:[#allocation2 + $0x8] sm:$0xff]
    %v117 = vld [vmem:[#allocation2 + $0x10] sm:$0xff]
    %v118 = vld [vmem:[#allocation2 + $0x18] sm:$0xff]
    %v119 = vld [vmem:[#allocation2 + $0x20] sm:$0xff]
    %v120 = vld [vmem:[#allocation2 + $0x28] sm:$0xff]
    %v121 = vld [vmem:[#allocation2 + $0x30] sm:$0xff]
    %v122 = vld [vmem:[#allocation2 + $0x38] sm:$0xff]
    %v123 = vld [vmem:[#allocation5] sm:$0x1]
    %v125 = vperm.slane %v123, 0
    %v127 = vmul.f32 %v115, %v125
    %v128 = vmul.f32 %v116, %v125
    %v129 = vmul.f32 %v117, %v125
    %v130 = vmul.f32 %v118, %v125
    %v131 = vmul.f32 %v119, %v125
    %v132 = vmul.f32 %v120, %v125
    %v133 = vmul.f32 %v121, %v125
    %v134 = vmul.f32 %v122, %v125
    %v135 = vld [vmem:[%s2] sm:$0x1]
    %v137 = vperm.slane %v135, 0
    %v139 = vadd.f32 %v127, %v137
    %v140 = vadd.f32 %v128, %v137
    %v141 = vadd.f32 %v129, %v137
    %v142 = vadd.f32 %v130, %v137
    %v143 = vadd.f32 %v131, %v137
    %v144 = vadd.f32 %v132, %v137
    %v145 = vadd.f32 %v133, %v137
    %v146 = vadd.f32 %v134, %v137
    %v147 = vpack.c.bf16 %v140, %v139
    %v148 = vpack.c.bf16 %v142, %v141
    %v149 = vpack.c.bf16 %v144, %v143
    %v150 = vpack.c.bf16 %v146, %v145
    %v151 = vld [vmem:[#allocation7] sm:$0xf]
    %v152 = vld [vmem:[#allocation7 + $0x4] sm:$0xf]
    %v153 = vld [vmem:[#allocation7 + $0x8] sm:$0xf]
    %v154 = vld [vmem:[#allocation7 + $0xc] sm:$0xf]
    %v155 = vld [vmem:[#allocation7 + $0x10] sm:$0xf]
    %v156 = vld [vmem:[#allocation7 + $0x14] sm:$0xf]
    %v157 = vld [vmem:[#allocation7 + $0x18] sm:$0xf]
    %v158 = vld [vmem:[#allocation7 + $0x1c] sm:$0xf]
    %v159 = vld [vmem:[#allocation7 + $0x20] sm:$0xf]
    %v160 = vld [vmem:[#allocation7 + $0x24] sm:$0xf]
    %v161 = vld [vmem:[#allocation7 + $0x28] sm:$0xf]
    %v162 = vld [vmem:[#allocation7 + $0x2c] sm:$0xf]
    %v163 = vld [vmem:[#allocation7 + $0x30] sm:$0xf]
    %v164 = vld [vmem:[#allocation7 + $0x34] sm:$0xf]
    %v165 = vld [vmem:[#allocation7 + $0x38] sm:$0xf]
    %v166 = vld [vmem:[#allocation7 + $0x3c] sm:$0xf]
    %v167 = vld [vmem:[%s4] sm:$0x1]
    %v169 = vperm.slane %v167, 0
    %v187 = vunpack.c.l.b16 %v151
    %v188 = vunpack.c.l.b16 %v152
    %v189 = vunpack.c.l.b16 %v153
    %v190 = vunpack.c.l.b16 %v154
    %v191 = vunpack.c.l.b16 %v155
    %v192 = vunpack.c.l.b16 %v156
    %v193 = vunpack.c.l.b16 %v157
    %v194 = vunpack.c.l.b16 %v158
    %v195 = vunpack.c.l.b16 %v159
    %v196 = vunpack.c.l.b16 %v160
    %v197 = vunpack.c.l.b16 %v161
    %v198 = vunpack.c.l.b16 %v162
    %v199 = vunpack.c.l.b16 %v163
    %v200 = vunpack.c.l.b16 %v164
    %v201 = vunpack.c.l.b16 %v165
    %v202 = vunpack.c.l.b16 %v166
    %v203 = vpack.c.b16 %v188, %v187
    %v204 = vpack.c.b16 %v190, %v189
    %v205 = vpack.c.b16 %v192, %v191
    %v206 = vpack.c.b16 %v194, %v193
    %v207 = vpack.c.b16 %v196, %v195
    %v208 = vpack.c.b16 %v198, %v197
    %v209 = vpack.c.b16 %v200, %v199
    %v210 = vpack.c.b16 %v202, %v201
    %219 = vmatpush.bf16.msra.mxu0 %v210
    %220 = vmatpush.bf16.msra.mxu0 %v209
    %221 = vmatpush.bf16.msra.mxu0 %v208
    %222 = vmatpush.bf16.msra.mxu0 %v207
    %223 = vmatpush.bf16.msra.mxu0 %v206
    %224 = vmatpush.bf16.msra.mxu0 %v205
    %225 = vmatpush.bf16.msra.mxu0 %v204
    %226 = vmatpush.bf16.msra.mxu0 %v203
    %227 = vmatmul.bf16.gmra.mxu0 %v147
    %v228 = vpop.f32.mrf.mxu0
    %v229 = vadd.f32 %v169, %v228
    %v230 = vpop.f32.mrf.mxu0
    %v231 = vadd.f32 %v169, %v230
    %232 = vmatmul.bf16.gmra.mxu0 %v148
    %v233 = vpop.f32.mrf.mxu0
    %v234 = vadd.f32 %v169, %v233
    %v235 = vpop.f32.mrf.mxu0
    %v236 = vadd.f32 %v169, %v235
    %237 = vmatmul.bf16.gmra.mxu0 %v149
    %v238 = vpop.f32.mrf.mxu0
    %v239 = vadd.f32 %v169, %v238
    %v240 = vpop.f32.mrf.mxu0
    %v241 = vadd.f32 %v169, %v240
    %242 = vmatmul.bf16.gmra.mxu0 %v150
    %v243 = vpop.f32.mrf.mxu0
    %v244 = vadd.f32 %v169, %v243
    %v245 = vpop.f32.mrf.mxu0
    %v246 = vadd.f32 %v169, %v245
    %247 = vdwg.mxu0
    %v248 = vmax.f32 %v229, 0.0
    %v249 = vmax.f32 %v231, 0.0
    %v250 = vmax.f32 %v234, 0.0
    %v251 = vmax.f32 %v236, 0.0
    %v252 = vmax.f32 %v239, 0.0
    %v253 = vmax.f32 %v241, 0.0
    %v254 = vmax.f32 %v244, 0.0
    %v255 = vmax.f32 %v246, 0.0
    %v256 = vpack.c.bf16 %v249, %v248
    %v257 = vpack.c.bf16 %v251, %v250
    %v258 = vpack.c.bf16 %v253, %v252
    %v259 = vpack.c.bf16 %v255, %v254
    %v260 = vld [vmem:[#allocation8] sm:$0xf]
    %v261 = vld [vmem:[#allocation8 + $0x4] sm:$0xf]
    %v262 = vld [vmem:[#allocation8 + $0x8] sm:$0xf]
    %v263 = vld [vmem:[#allocation8 + $0xc] sm:$0xf]
    %v264 = vld [vmem:[#allocation8 + $0x10] sm:$0xf]
    %v265 = vld [vmem:[#allocation8 + $0x14] sm:$0xf]
    %v266 = vld [vmem:[#allocation8 + $0x18] sm:$0xf]
    %v267 = vld [vmem:[#allocation8 + $0x1c] sm:$0xf]
    %v268 = vld [vmem:[#allocation8 + $0x20] sm:$0xf]
    %v269 = vld [vmem:[#allocation8 + $0x24] sm:$0xf]
    %v270 = vld [vmem:[#allocation8 + $0x28] sm:$0xf]
    %v271 = vld [vmem:[#allocation8 + $0x2c] sm:$0xf]
    %v272 = vld [vmem:[#allocation8 + $0x30] sm:$0xf]
    %v273 = vld [vmem:[#allocation8 + $0x34] sm:$0xf]
    %v274 = vld [vmem:[#allocation8 + $0x38] sm:$0xf]
    %v275 = vld [vmem:[#allocation8 + $0x3c] sm:$0xf]
    %v276 = vld [vmem:[%s6] sm:$0x1]
    %v278 = vperm.slane %v276, 0
    %v296 = vunpack.c.l.b16 %v260
    %v297 = vunpack.c.l.b16 %v261
    %v298 = vunpack.c.l.b16 %v262
    %v299 = vunpack.c.l.b16 %v263
    %v300 = vunpack.c.l.b16 %v264
    %v301 = vunpack.c.l.b16 %v265
    %v302 = vunpack.c.l.b16 %v266
    %v303 = vunpack.c.l.b16 %v267
    %v304 = vunpack.c.l.b16 %v268
    %v305 = vunpack.c.l.b16 %v269
    %v306 = vunpack.c.l.b16 %v270
    %v307 = vunpack.c.l.b16 %v271
    %v308 = vunpack.c.l.b16 %v272
    %v309 = vunpack.c.l.b16 %v273
    %v310 = vunpack.c.l.b16 %v274
    %v311 = vunpack.c.l.b16 %v275
    %v312 = vpack.c.b16 %v297, %v296
    %v313 = vpack.c.b16 %v299, %v298
    %v314 = vpack.c.b16 %v301, %v300
    %v315 = vpack.c.b16 %v303, %v302
    %v316 = vpack.c.b16 %v305, %v304
    %v317 = vpack.c.b16 %v307, %v306
    %v318 = vpack.c.b16 %v309, %v308
    %v319 = vpack.c.b16 %v311, %v310
    %328 = vmatpush.bf16.msra.mxu0 %v319
    %329 = vmatpush.bf16.msra.mxu0 %v318
    %330 = vmatpush.bf16.msra.mxu0 %v317
    %331 = vmatpush.bf16.msra.mxu0 %v316
    %332 = vmatpush.bf16.msra.mxu0 %v315
    %333 = vmatpush.bf16.msra.mxu0 %v314
    %334 = vmatpush.bf16.msra.mxu0 %v313
    %335 = vmatpush.bf16.msra.mxu0 %v312
    %336 = vmatmul.bf16.gmra.mxu0 %v256
    %v337 = vpop.f32.mrf.mxu0
    %v338 = vadd.f32 %v278, %v337
    %v339 = vpop.f32.mrf.mxu0
    %v340 = vadd.f32 %v278, %v339
    %341 = vmatmul.bf16.gmra.mxu0 %v257
    %v342 = vpop.f32.mrf.mxu0
    %v343 = vadd.f32 %v278, %v342
    %v344 = vpop.f32.mrf.mxu0
    %v345 = vadd.f32 %v278, %v344
    %346 = vmatmul.bf16.gmra.mxu0 %v258
    %v347 = vpop.f32.mrf.mxu0
    %v348 = vadd.f32 %v278, %v347
    %v349 = vpop.f32.mrf.mxu0
    %v350 = vadd.f32 %v278, %v349
    %351 = vmatmul.bf16.gmra.mxu0 %v259
    %v352 = vpop.f32.mrf.mxu0
    %v353 = vadd.f32 %v278, %v352
    %v354 = vpop.f32.mrf.mxu0
    %v355 = vadd.f32 %v278, %v354
    %356 = vdwg.mxu0
    %v357 = vmax.f32 %v338, 0.0
    %v358 = vmax.f32 %v340, 0.0
    %v359 = vmax.f32 %v343, 0.0
    %v360 = vmax.f32 %v345, 0.0
    %v361 = vmax.f32 %v348, 0.0
    %v362 = vmax.f32 %v350, 0.0
    %v363 = vmax.f32 %v353, 0.0
    %v364 = vmax.f32 %v355, 0.0
    %v365 = vpack.c.bf16 %v358, %v357
    %v366 = vpack.c.bf16 %v360, %v359
    %v367 = vpack.c.bf16 %v362, %v361
    %v368 = vpack.c.bf16 %v364, %v363
    %v369 = vld [vmem:[#allocation10] sm:$0xf]
    %v370 = vld [vmem:[#allocation10 + $0x4] sm:$0xf]
    %v371 = vld [vmem:[#allocation10 + $0x8] sm:$0xf]
    %v372 = vld [vmem:[#allocation10 + $0xc] sm:$0xf]
    %v373 = vld [vmem:[#allocation10 + $0x10] sm:$0xf]
    %v374 = vld [vmem:[#allocation10 + $0x14] sm:$0xf]
    %v375 = vld [vmem:[#allocation10 + $0x18] sm:$0xf]
    %v376 = vld [vmem:[#allocation10 + $0x1c] sm:$0xf]
    %v377 = vld [vmem:[#allocation10 + $0x20] sm:$0xf]
    %v378 = vld [vmem:[#allocation10 + $0x24] sm:$0xf]
    %v379 = vld [vmem:[#allocation10 + $0x28] sm:$0xf]
    %v380 = vld [vmem:[#allocation10 + $0x2c] sm:$0xf]
    %v381 = vld [vmem:[#allocation10 + $0x30] sm:$0xf]
    %v382 = vld [vmem:[#allocation10 + $0x34] sm:$0xf]
    %v383 = vld [vmem:[#allocation10 + $0x38] sm:$0xf]
    %v384 = vld [vmem:[#allocation10 + $0x3c] sm:$0xf]
    %v385 = vld [vmem:[%s8] sm:$0x1]
    %v387 = vperm.slane %v385, 0
    %v405 = vunpack.c.l.b16 %v369
    %v406 = vunpack.c.l.b16 %v370
    %v407 = vunpack.c.l.b16 %v371
    %v408 = vunpack.c.l.b16 %v372
    %v409 = vunpack.c.l.b16 %v373
    %v410 = vunpack.c.l.b16 %v374
    %v411 = vunpack.c.l.b16 %v375
    %v412 = vunpack.c.l.b16 %v376
    %v413 = vunpack.c.l.b16 %v377
    %v414 = vunpack.c.l.b16 %v378
    %v415 = vunpack.c.l.b16 %v379
    %v416 = vunpack.c.l.b16 %v380
    %v417 = vunpack.c.l.b16 %v381
    %v418 = vunpack.c.l.b16 %v382
    %v419 = vunpack.c.l.b16 %v383
    %v420 = vunpack.c.l.b16 %v384
    %v421 = vpack.c.b16 %v406, %v405
    %v422 = vpack.c.b16 %v408, %v407
    %v423 = vpack.c.b16 %v410, %v409
    %v424 = vpack.c.b16 %v412, %v411
    %v425 = vpack.c.b16 %v414, %v413
    %v426 = vpack.c.b16 %v416, %v415
    %v427 = vpack.c.b16 %v418, %v417
    %v428 = vpack.c.b16 %v420, %v419
    %437 = vmatpush.bf16.msra.mxu0 %v428
    %438 = vmatpush.bf16.msra.mxu0 %v427
    %439 = vmatpush.bf16.msra.mxu0 %v426
    %440 = vmatpush.bf16.msra.mxu0 %v425
    %441 = vmatpush.bf16.msra.mxu0 %v424
    %442 = vmatpush.bf16.msra.mxu0 %v423
    %443 = vmatpush.bf16.msra.mxu0 %v422
    %444 = vmatpush.bf16.msra.mxu0 %v421
    %445 = vmatmul.bf16.gmra.mxu0 %v365
    %v446 = vpop.f32.mrf.mxu0
    %v447 = vadd.f32 %v387, %v446
    %v448 = vpop.f32.mrf.mxu0
    %v449 = vadd.f32 %v387, %v448
    %450 = vmatmul.bf16.gmra.mxu0 %v366
    %v451 = vpop.f32.mrf.mxu0
    %v452 = vadd.f32 %v387, %v451
    %v453 = vpop.f32.mrf.mxu0
    %v454 = vadd.f32 %v387, %v453
    %455 = vmatmul.bf16.gmra.mxu0 %v367
    %v456 = vpop.f32.mrf.mxu0
    %v457 = vadd.f32 %v387, %v456
    %v458 = vpop.f32.mrf.mxu0
    %v459 = vadd.f32 %v387, %v458
    %460 = vmatmul.bf16.gmra.mxu0 %v368
    %v461 = vpop.f32.mrf.mxu0
    %v462 = vadd.f32 %v387, %v461
    %v463 = vpop.f32.mrf.mxu0
    %v464 = vadd.f32 %v387, %v463
    %465 = vdwg.mxu0
    %v466 = vadd.f32 %v447, %v139
    %v467 = vadd.f32 %v449, %v140
    %v468 = vadd.f32 %v452, %v141
    %v469 = vadd.f32 %v454, %v142
    %v470 = vadd.f32 %v457, %v143
    %v471 = vadd.f32 %v459, %v144
    %v472 = vadd.f32 %v462, %v145
    %v473 = vadd.f32 %v464, %v146
    %v474 = vld [vmem:[%s9] sm:$0x1]
    %v476 = vperm.slane %v474, 0
    %v478 = vmul.f32 %v466, %v476
    %v479 = vmul.f32 %v467, %v476
    %v480 = vmul.f32 %v468, %v476
    %v481 = vmul.f32 %v469, %v476
    %v482 = vmul.f32 %v470, %v476
    %v483 = vmul.f32 %v471, %v476
    %v484 = vmul.f32 %v472, %v476
    %v485 = vmul.f32 %v473, %v476
    %v486 = vld [vmem:[%s10] sm:$0x1]
    %v488 = vperm.slane %v486, 0
    %v490 = vadd.f32 %v478, %v488
    %v491 = vadd.f32 %v479, %v488
    %v492 = vadd.f32 %v480, %v488
    %v493 = vadd.f32 %v481, %v488
    %v494 = vadd.f32 %v482, %v488
    %v495 = vadd.f32 %v483, %v488
    %v496 = vadd.f32 %v484, %v488
    %v497 = vadd.f32 %v485, %v488
    %v498 = vmax.f32 %v490, 0.0
    %v499 = vmax.f32 %v491, 0.0
    %v500 = vmax.f32 %v492, 0.0
    %v501 = vmax.f32 %v493, 0.0
    %v502 = vmax.f32 %v494, 0.0
    %v503 = vmax.f32 %v495, 0.0
    %v504 = vmax.f32 %v496, 0.0
    %v505 = vmax.f32 %v497, 0.0
    %v506 = vpack.c.bf16 %v498, %v498
    %v507 = vpack.c.bf16 %v499, %v499
    %v508 = vpack.c.bf16 %v500, %v500
    %v509 = vpack.c.bf16 %v501, %v501
    %v510 = vpack.c.bf16 %v502, %v502
    %v511 = vpack.c.bf16 %v503, %v503
    %v512 = vpack.c.bf16 %v504, %v504
    %v513 = vpack.c.bf16 %v505, %v505
    %514 = vst [vmem:[#allocation11] sm:$0xf] %v506
    %515 = vst [vmem:[#allocation11 + $0x4] sm:$0xf] %v507
    %516 = vst [vmem:[#allocation11 + $0x8] sm:$0xf] %v508
    %517 = vst [vmem:[#allocation11 + $0xc] sm:$0xf] %v509
    %518 = vst [vmem:[#allocation11 + $0x10] sm:$0xf] %v510
    %519 = vst [vmem:[#allocation11 + $0x14] sm:$0xf] %v511
    %520 = vst [vmem:[#allocation11 + $0x18] sm:$0xf] %v512
    %521 = vst [vmem:[#allocation11 + $0x1c] sm:$0xf] %v513
    // Predicated region
    $region66: #{tpu_custom_call.1} parent=1 // pred_check
      _
    $region67: #{tpu_custom_call.1} parent=1 // pred_check_branch
      %523 = sbr.rel (0) target = $region69
    $region68: #{tpu_custom_call.1} parent=1 // pred_region
      %525 = vsyncadd [#allocation4], 0
      %s526 = sshll.u32 [#allocation11], 4
      %s527 = int_to_ptr.vmem [resolvable:$true] %s526
      %s528 = sshll.u32 %s11, 4
      %s529 = int_to_ptr.hbm [resolvable:$true] %s528
      %534 = dma.vmem_to_hbm [thread:$0]  %s527, 512, %s529, [#allocation4], 64, 64, 4
    $region69: #{tpu_custom_call.1} parent=1 // pred_fallthru
      _
    // Predicated region
    $region70: #{tpu_custom_call.1} parent=1 // pred_check
      _
    $region71: #{tpu_custom_call.1} parent=1 // pred_check_branch
      %536 = sbr.rel (0) target = $region73
    $region72: #{tpu_custom_call.1} parent=1 // pred_region
      %538 = dma.done [#allocation4], 512
    $region73: #{tpu_custom_call.1} parent=1 // pred_fallthru
      _
    %539 = vsyncpa [#allocation3], 1
    %540 = vsyncpa [#allocation6], 1
    %541 = vsyncpa [#allocation9], 1
    %542 = vsyncpa [#allocation4], 1

</llo_original>
